<compile_context>
chip_gen: v7x
topology: tpu7x:2x2x1
jax: 0.10.0
libtpu: 0.0.40
codegen_flags: <defaults>
</compile_context>

<pallas_src>
import functools

import jax
import jax.numpy as jnp
from jax.experimental import pallas as pl
from jax.experimental.pallas import tpu as pltpu


def _bn2d_stats_kernel(x_ref, gamma_ref, beta_ref, scale_ref, shift_ref,
                       sum_acc, sq_acc, *, eps: float, inv_count: float):
    """Accumulate per-channel sum / sumsq; fold affine into scale/shift at the end.

    x_ref:     (1, C, T) block of the (N, C, HW) input
    gamma_ref: (C, 1), beta_ref: (C, 1)
    scale_ref: (C, 1) f32 output, shift_ref: (C, 1) f32 output
    sum_acc / sq_acc: (C, 1) f32 VMEM scratch accumulators
    """
    first = (pl.program_id(0) == 0) & (pl.program_id(1) == 0)
    last = ((pl.program_id(0) == pl.num_programs(0) - 1)
            & (pl.program_id(1) == pl.num_programs(1) - 1))

    @pl.when(first)
    def _init():
        sum_acc[...] = jnp.zeros_like(sum_acc)
        sq_acc[...] = jnp.zeros_like(sq_acc)

    x = x_ref[0].astype(jnp.float32)  # (C, T); f32 accumulation for stability
    sum_acc[...] += jnp.sum(x, axis=1, keepdims=True)
    sq_acc[...] += jnp.sum(x * x, axis=1, keepdims=True)

    @pl.when(last)
    def _finalize():
        mean = sum_acc[...] * inv_count
        # Single-pass E[x^2] - mean^2 with f32 accumulators; clamp for safety.
        var = jnp.maximum(sq_acc[...] * inv_count - mean * mean, 0.0)
        inv_std = jax.lax.rsqrt(var + eps)
        scale = gamma_ref[...].astype(jnp.float32) * inv_std
        scale_ref[...] = scale
        shift_ref[...] = beta_ref[...].astype(jnp.float32) - mean * scale


def _bn2d_apply_kernel(x_ref, scale_ref, shift_ref, o_ref):
    """y = x * scale + shift (per-channel, broadcast over lanes)."""
    x = x_ref[0].astype(jnp.float32)              # (C, T)
    y = x * scale_ref[...] + shift_ref[...]       # one mul + one add per element
    o_ref[0] = y.astype(o_ref.dtype)


def _pick_hw_tile(hw: int, target: int) -> int:
    """Largest multiple-of-128 tile <= target dividing hw, else the full extent."""
    if hw <= target:
        return hw
    t = (target // 128) * 128
    while t >= 128:
        if hw % t == 0:
            return t
        t -= 128
    return hw  # fallback: full-extent block (always a legal block shape)


def batch_norm_2d(x, gamma, beta, *, eps: float = 1e-5, lane_tile_target: int = 2048):
    """x: (N, C, H, W) NCHW; gamma/beta: (C,). Returns normalized (N, C, H, W)."""
    n, c, h, w = x.shape
    hw = h * w
    hw_tile = _pick_hw_tile(hw, lane_tile_target)
    num_t = hw // hw_tile

    # Free reshape (contiguous collapse of trailing dims) -- no transpose, no HBM pass.
    x3 = x.reshape(n, c, hw)
    g2d = gamma.reshape(c, 1)
    b2d = beta.reshape(c, 1)

    inv_count = 1.0 / float(n * hw)

    # Phase 1: per-channel statistics, folded into scale/shift constants.
    scale, shift = pl.pallas_call(
        functools.partial(_bn2d_stats_kernel, eps=eps, inv_count=inv_count),
        out_shape=(jax.ShapeDtypeStruct((c, 1), jnp.float32),
                   jax.ShapeDtypeStruct((c, 1), jnp.float32)),
        grid=(n, num_t),
        in_specs=[
            pl.BlockSpec((1, c, hw_tile), lambda i, t: (i, 0, t)),
            pl.BlockSpec((c, 1), lambda i, t: (0, 0)),   # resident, not re-fetched
            pl.BlockSpec((c, 1), lambda i, t: (0, 0)),
        ],
        out_specs=(
            pl.BlockSpec((c, 1), lambda i, t: (0, 0)),
            pl.BlockSpec((c, 1), lambda i, t: (0, 0)),
        ),
        scratch_shapes=[
            pltpu.VMEM((c, 1), jnp.float32),  # sum accumulator
            pltpu.VMEM((c, 1), jnp.float32),  # sum-of-squares accumulator
        ],
        compiler_params=pltpu.CompilerParams(
            dimension_semantics=("arbitrary", "arbitrary")),
    )(x3, g2d, b2d)

    # Phase 2: normalize. Fully independent per block -> parallel on both axes
    # (lets v7x shard the grid across its 2 TensorCores).
    out3 = pl.pallas_call(
        _bn2d_apply_kernel,
        out_shape=jax.ShapeDtypeStruct((n, c, hw), x.dtype),
        grid=(n, num_t),
        in_specs=[
            pl.BlockSpec((1, c, hw_tile), lambda i, t: (i, 0, t)),
            pl.BlockSpec((c, 1), lambda i, t: (0, 0)),
            pl.BlockSpec((c, 1), lambda i, t: (0, 0)),
        ],
        out_specs=pl.BlockSpec((1, c, hw_tile), lambda i, t: (i, 0, t)),
        compiler_params=pltpu.CompilerParams(
            dimension_semantics=("parallel", "parallel")),
    )(x3, scale, shift)

    return out3.reshape(n, c, h, w)


if __name__ == "__main__":
    key = jax.random.PRNGKey(0)
    kx, kg, kb = jax.random.split(key, 3)

    # (batch, channel2, channel1, time). The SpeechBrain wrapper builds
    # nn.BatchNorm2d(input_shape[-1]), which normalizes dim 1, so dim1 == dim-1.
    N, C, H, W = 2, 16, 16, 16
    x = jax.random.normal(kx, (N, C, H, W), dtype=jnp.float32)

    # Deterministic synthetic affine parameters (shapes from BatchNorm2d(C)).
    gamma = 1.0 + 0.1 * jax.random.normal(kg, (C,), dtype=jnp.float32)
    beta = 0.1 * jax.random.normal(kb, (C,), dtype=jnp.float32)
    eps = 1e-5

    # Small lane_tile_target forces multiple HW tiles -> exercises the
    # accumulator path across both grid axes (HW = 256 -> 2 tiles of 128).
    out = batch_norm_2d(x, gamma, beta, eps=eps, lane_tile_target=128)
    out = jax.block_until_ready(out)

    # Pure-JAX reference check (training-mode batch norm).
    mean = jnp.mean(x, axis=(0, 2, 3), keepdims=True)
    var = jnp.mean((x - mean) ** 2, axis=(0, 2, 3), keepdims=True)
    ref = (x - mean) / jnp.sqrt(var + eps) * gamma.reshape(1, C, 1, 1) + beta.reshape(1, C, 1, 1)
    assert out.shape == x.shape and out.dtype == x.dtype
    err = float(jnp.max(jnp.abs(out - ref)))
    assert err < 1e-4, f"max abs err {err}"

    print("KERNEL_OK")
</pallas_src>

<mosaic_0001>
module attributes {stable_mosaic.version = 11 : i64} {
  func.func @_bn2d_stats_kernel(%arg0: i32, %arg1: i32, %arg2: memref<1x16x128xf32, #tpu.memory_space<vmem>>, %arg3: memref<16x1xf32, #tpu.memory_space<vmem>>, %arg4: memref<16x1xf32, #tpu.memory_space<vmem>>, %arg5: memref<16x1xf32, #tpu.memory_space<vmem>>, %arg6: memref<16x1xf32, #tpu.memory_space<vmem>>, %arg7: memref<16x1xf32, #tpu.memory_space<vmem>>, %arg8: memref<16x1xf32, #tpu.memory_space<vmem>>) attributes {dimension_semantics = [#tpu.dimension_semantics<arbitrary>, #tpu.dimension_semantics<arbitrary>], iteration_bounds = array<i64: 2, 2>, scalar_prefetch = 0 : i64, scratch_operands = 2 : i64, tpu.core_type = #tpu.core_type<tc>, window_params = [{transform_indices = @transform_0, window_bounds = array<i64: 1, 16, 128>}, {pipeline_mode = #tpu.pipeline_mode<synchronous>, transform_indices = @transform_1, window_bounds = array<i64: 16, 1>}, {pipeline_mode = #tpu.pipeline_mode<synchronous>, transform_indices = @transform_2, window_bounds = array<i64: 16, 1>}, {pipeline_mode = #tpu.pipeline_mode<synchronous>, transform_indices = @transform_3, window_bounds = array<i64: 16, 1>}, {pipeline_mode = #tpu.pipeline_mode<synchronous>, transform_indices = @transform_4, window_bounds = array<i64: 16, 1>}]} {
    %c0_i32 = arith.constant 0 : i32
    %0 = arith.cmpi eq, %arg0, %c0_i32 : i32
    %c0_i32_0 = arith.constant 0 : i32
    %1 = arith.cmpi eq, %arg1, %c0_i32_0 : i32
    %2 = arith.andi %0, %1 : i1
    %c1_i32 = arith.constant 1 : i32
    %3 = arith.cmpi eq, %arg0, %c1_i32 : i32
    %c1_i32_1 = arith.constant 1 : i32
    %4 = arith.cmpi eq, %arg1, %c1_i32_1 : i32
    %5 = arith.andi %3, %4 : i1
    %6 = arith.extui %2 : i1 to i32
    %c0_i32_2 = arith.constant 0 : i32
    %7 = arith.cmpi ne, %6, %c0_i32_2 : i32
    scf.if %7 {
      %cst_15 = arith.constant 0.000000e+00 : f32
      %23 = vector.broadcast %cst_15 : f32 to vector<16x1xf32>
      %c0_16 = arith.constant 0 : index
      %c0_17 = arith.constant 0 : index
      %24 = vector.load %arg7[%c0_16, %c0_17] : memref<16x1xf32, #tpu.memory_space<vmem>>, vector<16x1xf32>
      tpu.vector_store %arg7[%c0_16, %c0_17], %23 {strides = array<i32>} : memref<16x1xf32, #tpu.memory_space<vmem>>, vector<16x1xf32>,
      %cst_18 = arith.constant 0.000000e+00 : f32
      %25 = vector.broadcast %cst_18 : f32 to vector<16x1xf32>
      %c0_19 = arith.constant 0 : index
      %c0_20 = arith.constant 0 : index
      %26 = vector.load %arg8[%c0_19, %c0_20] : memref<16x1xf32, #tpu.memory_space<vmem>>, vector<16x1xf32>
      tpu.vector_store %arg8[%c0_19, %c0_20], %25 {strides = array<i32>} : memref<16x1xf32, #tpu.memory_space<vmem>>, vector<16x1xf32>,
    } else {
    }
    %c0 = arith.constant 0 : index
    %c0_3 = arith.constant 0 : index
    %c0_4 = arith.constant 0 : index
    %8 = vector.load %arg2[%c0, %c0_3, %c0_4] : memref<1x16x128xf32, #tpu.memory_space<vmem>>, vector<1x16x128xf32>
    %9 = vector.shape_cast %8 : vector<1x16x128xf32> to vector<16x128xf32>
    %c0_5 = arith.constant 0 : index
    %c0_6 = arith.constant 0 : index
    %10 = vector.load %arg7[%c0_5, %c0_6] : memref<16x1xf32, #tpu.memory_space<vmem>>, vector<16x1xf32>
    %cst = arith.constant dense<0.000000e+00> : vector<16xf32>
    %11 = vector.multi_reduction <add>, %9, %cst [1] : vector<16x128xf32> to vector<16xf32>
    %12 = vector.shape_cast %11 : vector<16xf32> to vector<16x1xf32>
    %13 = arith.addf %10, %12 : vector<16x1xf32>
    %c0_7 = arith.constant 0 : index
    %c0_8 = arith.constant 0 : index
    %14 = vector.load %arg7[%c0_7, %c0_8] : memref<16x1xf32, #tpu.memory_space<vmem>>, vector<16x1xf32>
    tpu.vector_store %arg7[%c0_7, %c0_8], %13 {strides = array<i32>} : memref<16x1xf32, #tpu.memory_space<vmem>>, vector<16x1xf32>,
    %c0_9 = arith.constant 0 : index
    %c0_10 = arith.constant 0 : index
    %15 = vector.load %arg8[%c0_9, %c0_10] : memref<16x1xf32, #tpu.memory_space<vmem>>, vector<16x1xf32>
    %16 = arith.mulf %9, %9 : vector<16x128xf32>
    %cst_11 = arith.constant dense<0.000000e+00> : vector<16xf32>
    %17 = vector.multi_reduction <add>, %16, %cst_11 [1] : vector<16x128xf32> to vector<16xf32>
    %18 = vector.shape_cast %17 : vector<16xf32> to vector<16x1xf32>
    %19 = arith.addf %15, %18 : vector<16x1xf32>
    %c0_12 = arith.constant 0 : index
    %c0_13 = arith.constant 0 : index
    %20 = vector.load %arg8[%c0_12, %c0_13] : memref<16x1xf32, #tpu.memory_space<vmem>>, vector<16x1xf32>
    tpu.vector_store %arg8[%c0_12, %c0_13], %19 {strides = array<i32>} : memref<16x1xf32, #tpu.memory_space<vmem>>, vector<16x1xf32>,
    %21 = arith.extui %5 : i1 to i32
    %c0_i32_14 = arith.constant 0 : i32
    %22 = arith.cmpi ne, %21, %c0_i32_14 : i32
    scf.if %22 {
      %c0_15 = arith.constant 0 : index
      %c0_16 = arith.constant 0 : index
      %23 = vector.load %arg7[%c0_15, %c0_16] : memref<16x1xf32, #tpu.memory_space<vmem>>, vector<16x1xf32>
      %cst_17 = arith.constant 0.001953125 : f32
      %24 = vector.broadcast %cst_17 : f32 to vector<16x1xf32>
      %25 = arith.mulf %23, %24 : vector<16x1xf32>
      %c0_18 = arith.constant 0 : index
      %c0_19 = arith.constant 0 : index
      %26 = vector.load %arg8[%c0_18, %c0_19] : memref<16x1xf32, #tpu.memory_space<vmem>>, vector<16x1xf32>
      %cst_20 = arith.constant 0.001953125 : f32
      %27 = vector.broadcast %cst_20 : f32 to vector<16x1xf32>
      %28 = arith.mulf %26, %27 : vector<16x1xf32>
      %29 = arith.mulf %25, %25 : vector<16x1xf32>
      %30 = arith.subf %28, %29 : vector<16x1xf32>
      %cst_21 = arith.constant 0.000000e+00 : f32
      %31 = vector.broadcast %cst_21 : f32 to vector<16x1xf32>
      %32 = arith.maximumf %30, %31 : vector<16x1xf32>
      %cst_22 = arith.constant 9.99999974E-6 : f32
      %33 = vector.broadcast %cst_22 : f32 to vector<16x1xf32>
      %34 = arith.addf %32, %33 : vector<16x1xf32>
      %35 = math.rsqrt %34 : vector<16x1xf32>
      %c0_23 = arith.constant 0 : index
      %c0_24 = arith.constant 0 : index
      %36 = vector.load %arg3[%c0_23, %c0_24] : memref<16x1xf32, #tpu.memory_space<vmem>>, vector<16x1xf32>
      %37 = arith.mulf %36, %35 : vector<16x1xf32>
      %c0_25 = arith.constant 0 : index
      %c0_26 = arith.constant 0 : index
      %38 = vector.load %arg5[%c0_25, %c0_26] : memref<16x1xf32, #tpu.memory_space<vmem>>, vector<16x1xf32>
      tpu.vector_store %arg5[%c0_25, %c0_26], %37 {strides = array<i32>} : memref<16x1xf32, #tpu.memory_space<vmem>>, vector<16x1xf32>,
      %c0_27 = arith.constant 0 : index
      %c0_28 = arith.constant 0 : index
      %39 = vector.load %arg4[%c0_27, %c0_28] : memref<16x1xf32, #tpu.memory_space<vmem>>, vector<16x1xf32>
      %40 = arith.mulf %25, %37 : vector<16x1xf32>
      %41 = arith.subf %39, %40 : vector<16x1xf32>
      %c0_29 = arith.constant 0 : index
      %c0_30 = arith.constant 0 : index
      %42 = vector.load %arg6[%c0_29, %c0_30] : memref<16x1xf32, #tpu.memory_space<vmem>>, vector<16x1xf32>
      tpu.vector_store %arg6[%c0_29, %c0_30], %41 {strides = array<i32>} : memref<16x1xf32, #tpu.memory_space<vmem>>, vector<16x1xf32>,
    } else {
    }
    return
  }
  func.func @transform_0(%arg0: i32, %arg1: i32) -> (i32, i32, i32) {
    %c0_i32 = arith.constant 0 : i32
    %c0_i32_0 = arith.constant 0 : i32
    return %arg0, %c0_i32, %arg1 : i32, i32, i32
  }
  func.func @transform_1(%arg0: i32, %arg1: i32) -> (i32, i32) {
    %c0_i32 = arith.constant 0 : i32
    %c0_i32_0 = arith.constant 0 : i32
    %c0_i32_1 = arith.constant 0 : i32
    return %c0_i32, %c0_i32_0 : i32, i32
  }
  func.func @transform_2(%arg0: i32, %arg1: i32) -> (i32, i32) {
    %c0_i32 = arith.constant 0 : i32
    %c0_i32_0 = arith.constant 0 : i32
    %c0_i32_1 = arith.constant 0 : i32
    return %c0_i32, %c0_i32_0 : i32, i32
  }
  func.func @transform_3(%arg0: i32, %arg1: i32) -> (i32, i32) {
    %c0_i32 = arith.constant 0 : i32
    %c0_i32_0 = arith.constant 0 : i32
    %c0_i32_1 = arith.constant 0 : i32
    return %c0_i32, %c0_i32_0 : i32, i32
  }
  func.func @transform_4(%arg0: i32, %arg1: i32) -> (i32, i32) {
    %c0_i32 = arith.constant 0 : i32
    %c0_i32_0 = arith.constant 0 : i32
    %c0_i32_1 = arith.constant 0 : i32
    return %c0_i32, %c0_i32_0 : i32, i32
  }
}

</mosaic_0001>

<llo_original>
// kernel: tpu_custom_call.1
$region0: #{tpu_custom_call.1}
  #allocation0 [shape = 'u32[]', space=smem, size = 0x4, offset = 0x4, fixed_abs, tag = 'smem constant byte address 0x4 - core index']
  #allocation1 [shape = 'u32[144,128]{1,0:T(1,128)}', space=vmem, size = 0x12000, scoped, tag = 'internal scratch']
  #allocation2 [shape = 'f32[16,1]{1,0:T(8,128)}', space=vmem, size = 0x2000, scoped, tag = 'scratch operand']
  #allocation3 [shape = 'f32[16,1]{1,0:T(8,128)}', space=vmem, size = 0x2000, scoped, tag = 'scratch operand']
  %s0 = inlined_call_operand.hbm [shape: f32[2,16,256], index: 0, kind: input, shape index: {}]
  %s1 = inlined_call_operand.vmem [shape: f32[16,1], index: 1, kind: input, shape index: {}]
  %s2 = inlined_call_operand.vmem [shape: f32[16,1], index: 2, kind: input, shape index: {}]
  %s3 = inlined_call_operand.vmem [shape: f32[16,1], index: 3, kind: output, shape index: {0}]
  %s4 = inlined_call_operand.vmem [shape: f32[16,1], index: 4, kind: output, shape index: {1}]
  %5 = xla_tuple %s3, %s4
  %s6 = sld [smem:[#allocation0]]
  $region65: #{tpu_custom_call.1} parent=0
    _
  %s8 = ssub.s32 1, %s6
  %s9 = scalar_select 0, %s8, %s6
  $region1: #{tpu_custom_call.1} parent=0
    #allocation4 [shape = 'u8[16384]{0}', space=vmem, size = 0x4000, scoped, tag = 'input window, operand 0']
    #allocation5 [shape = 's32[2]{0}', space=sflag, size = 0x8, scoped, tag = 'scoped memory for tpu_custom_call.1']
    %10 = vsyncpa [#allocation5], 0
    %s11 = scalar_lea.sflag [#allocation5], 1
    %12 = vsyncpa %s11, 0
    loop: start=0, step=1, limit=6
    $region2: #{tpu_custom_call.1} parent=1 // loop_pre_header
      _
    $region3: #{tpu_custom_call.1} parent=1 // loop_header
      %s14 = sphi 0, %s18
      %p15 = scmp.ge.s32.totalorder %s14, 6
      %s21 = sphi 0, %s33
      %s22 = sphi 0, %s29
      %s23 = sphi 0, %s21
      %s24 = sphi 0, %s22
      %s25 = sphi 0, %s23
      %s26 = sphi 0, %s24
      %s38 = sphi 0, %s40
      %s41 = sphi 0, %s38
      %s42 = sphi 0, %s41
      %s58 = sphi 0, %s42
      %s62 = sphi 0, %s62
      %s64 = sphi 0, %s62
      %s65 = sphi 0, %s64
      %s79 = sphi 0, %s65
      %s83 = sphi 0, %s83
      %s85 = sphi 0, %s83
      %s86 = sphi 0, %s85
      %s100 = sphi 0, %s86
      %s104 = sphi 0, %s104
      %s106 = sphi 0, %s104
      %s107 = sphi 0, %s106
      %s121 = sphi 0, %s107
      %s125 = sphi 0, %s125
      %s127 = sphi 0, %s125
      %s128 = sphi 0, %s127
      %s142 = sphi 0, %s128
    $region4: #{tpu_custom_call.1} parent=1 // loop_header_branch
      %17 = sbr.rel (%p15) target = $region8
    $region5: #{tpu_custom_call.1} parent=1 // loop_body
      %s19 = ssub.s32 %s14, 1
      %s20 = ssub.s32 %s14, 2
      %s27 = sadd.s32 1, %s22
      %p28 = scmp.ge.s32.totalorder %s27, 2
      %s29 = scalar_select %p28, 0, %s27
      %s30 = sadd.s32 1, %s21
      %s31 = scalar_select %p28, %s30, %s21
      %p32 = scmp.ge.s32.totalorder %s31, 2
      %s33 = scalar_select %p32, 0, %s31
      %s34 = ssub.s32 %s21, %s33
      %s35 = ssub.s32 %s22, %s29
      %s36 = sor.u32 %s34, %s35
      %p37 = scmp.eq.s32.totalorder %s36, 0
      %s39 = sadd.s32 %s38, 1
      %s40 = scalar_select %p37, %s38, %s39
      %p43 = pneg %p37
      %p44 = scmp.eq.s32.totalorder %s14, 3
      %p45 = por %p43, %p44
      %p46 = scmp.ne.s32.totalorder %s38, %s41
      %p47 = scmp.eq.s32.totalorder %s14, 0
      %p48 = por %p46, %p47
      %p49 = scmp.ne.s32.totalorder %s38, %s41
      %p50 = scmp.eq.s32.totalorder %s19, 3
      %p51 = por %p49, %p50
      %p52 = scmp.ne.s32.totalorder %s41, %s42
      %p53 = scmp.eq.s32.totalorder %s19, 0
      %p54 = por %p52, %p53
      %p55 = scmp.ne.s32.totalorder %s41, %s42
      %p56 = scmp.eq.s32.totalorder %s20, 3
      %p57 = por %p55, %p56
      %p59 = scmp.ne.s32.totalorder %s42, %s58
      %p60 = scmp.eq.s32.totalorder %s20, 0
      %p61 = por %p59, %p60
      %s63 = sadd.s32 %s62, 1
      %p66 = scmp.eq.s32.totalorder %s14, 3
      %p67 = scmp.ne.s32.totalorder %s62, %s64
      %p68 = scmp.eq.s32.totalorder %s14, 0
      %p69 = por %p67, %p68
      %p70 = scmp.ne.s32.totalorder %s62, %s64
      %p71 = scmp.eq.s32.totalorder %s19, 3
      %p72 = por %p70, %p71
      %p73 = scmp.ne.s32.totalorder %s64, %s65
      %p74 = scmp.eq.s32.totalorder %s19, 0
      %p75 = por %p73, %p74
      %p76 = scmp.ne.s32.totalorder %s64, %s65
      %p77 = scmp.eq.s32.totalorder %s20, 3
      %p78 = por %p76, %p77
      %p80 = scmp.ne.s32.totalorder %s65, %s79
      %p81 = scmp.eq.s32.totalorder %s20, 0
      %p82 = por %p80, %p81
      %s84 = sadd.s32 %s83, 1
      %p87 = scmp.eq.s32.totalorder %s14, 3
      %p88 = scmp.ne.s32.totalorder %s83, %s85
      %p89 = scmp.eq.s32.totalorder %s14, 0
      %p90 = por %p88, %p89
      %p91 = scmp.ne.s32.totalorder %s83, %s85
      %p92 = scmp.eq.s32.totalorder %s19, 3
      %p93 = por %p91, %p92
      %p94 = scmp.ne.s32.totalorder %s85, %s86
      %p95 = scmp.eq.s32.totalorder %s19, 0
      %p96 = por %p94, %p95
      %p97 = scmp.ne.s32.totalorder %s85, %s86
      %p98 = scmp.eq.s32.totalorder %s20, 3
      %p99 = por %p97, %p98
      %p101 = scmp.ne.s32.totalorder %s86, %s100
      %p102 = scmp.eq.s32.totalorder %s20, 0
      %p103 = por %p101, %p102
      %s105 = sadd.s32 %s104, 1
      %p108 = scmp.eq.s32.totalorder %s14, 3
      %p109 = scmp.ne.s32.totalorder %s104, %s106
      %p110 = scmp.eq.s32.totalorder %s14, 0
      %p111 = por %p109, %p110
      %p112 = scmp.ne.s32.totalorder %s104, %s106
      %p113 = scmp.eq.s32.totalorder %s19, 3
      %p114 = por %p112, %p113
      %p115 = scmp.ne.s32.totalorder %s106, %s107
      %p116 = scmp.eq.s32.totalorder %s19, 0
      %p117 = por %p115, %p116
      %p118 = scmp.ne.s32.totalorder %s106, %s107
      %p119 = scmp.eq.s32.totalorder %s20, 3
      %p120 = por %p118, %p119
      %p122 = scmp.ne.s32.totalorder %s107, %s121
      %p123 = scmp.eq.s32.totalorder %s20, 0
      %p124 = por %p122, %p123
      %s126 = sadd.s32 %s125, 1
      %p129 = scmp.eq.s32.totalorder %s14, 3
      %p130 = scmp.ne.s32.totalorder %s125, %s127
      %p131 = scmp.eq.s32.totalorder %s14, 0
      %p132 = por %p130, %p131
      %p133 = scmp.ne.s32.totalorder %s125, %s127
      %p134 = scmp.eq.s32.totalorder %s19, 3
      %p135 = por %p133, %p134
      %p136 = scmp.ne.s32.totalorder %s127, %s128
      %p137 = scmp.eq.s32.totalorder %s19, 0
      %p138 = por %p136, %p137
      %p139 = scmp.ne.s32.totalorder %s127, %s128
      %p140 = scmp.eq.s32.totalorder %s20, 3
      %p141 = por %p139, %p140
      %p143 = scmp.ne.s32.totalorder %s128, %s142
      %p144 = scmp.eq.s32.totalorder %s20, 0
      %p145 = por %p143, %p144
      %p146 = scmp.le.s32.totalorder 1, %s14
      %p147 = scmp.lt.s32.totalorder %s14, 5
      %p148 = pnand %p146, %p147
      %p149 = pneg %p148
      // Predicated region
      $region9: #{tpu_custom_call.1} parent=5 // pred_check
        _
      $region10: #{tpu_custom_call.1} parent=5 // pred_check_branch
        %151 = sbr.rel (%p148) target = $region12
      $region11: #{tpu_custom_call.1} parent=5 // pred_region
        %s152 = ssub.s32 %s14, 1
        // Predicated region
        $region13: #{tpu_custom_call.1} parent=11 // pred_check
          %p153 = pneg %p75
        $region14: #{tpu_custom_call.1} parent=11 // pred_check_branch
          %155 = sbr.rel (%p153) target = $region16
        $region15: #{tpu_custom_call.1} parent=11 // pred_region
          _
        $region16: #{tpu_custom_call.1} parent=11 // pred_fallthru
          _
        // Predicated region
        $region17: #{tpu_custom_call.1} parent=11 // pred_check
          %p156 = pneg %p96
        $region18: #{tpu_custom_call.1} parent=11 // pred_check_branch
          %158 = sbr.rel (%p156) target = $region20
        $region19: #{tpu_custom_call.1} parent=11 // pred_region
          _
        $region20: #{tpu_custom_call.1} parent=11 // pred_fallthru
          _
      $region12: #{tpu_custom_call.1} parent=5 // pred_fallthru
        _
      %p159 = scmp.lt.s32.totalorder %s14, 4
      // Predicated region
      $region21: #{tpu_custom_call.1} parent=5 // pred_check
        %p160 = pneg %p159
      $region22: #{tpu_custom_call.1} parent=5 // pred_check_branch
        %162 = sbr.rel (%p160) target = $region24
      $region23: #{tpu_custom_call.1} parent=5 // pred_region
        // Predicated region
        $region25: #{tpu_custom_call.1} parent=23 // pred_check
          %p163 = pneg %p48
        $region26: #{tpu_custom_call.1} parent=23 // pred_check_branch
          %165 = sbr.rel (%p163) target = $region28
        $region27: #{tpu_custom_call.1} parent=23 // pred_region
          %s166 = sand.u32 %s38, 1
          %s167 = scalar_lea.sflag [#allocation5], %s166
          %s168 = sand.u32 %s38, 1
          %s169 = smul.addr %s168, 16
          %s170 = scalar_lea.vmem [#allocation4], %s169
          %s172 = ssub.s32 256, 256
          %173 = vsyncadd %s167, %s172
          %s174 = smul.addr %s21, 4
          %s175 = sadd.s32 %s22, %s174
          %s176 = smul.addr %s175, 128
          %s177 = scalar_lea.hbm %s0, %s176
          %s178 = sshll.u32 %s170, 4
          %s179 = int_to_ptr.vmem [resolvable:$true] %s178
          %184 = dma.hbm_to_vmem [thread:$0]  %s177, 256, %s179, %s167, 256, 128, 8
        $region28: #{tpu_custom_call.1} parent=23 // pred_fallthru
          _
      $region24: #{tpu_custom_call.1} parent=5 // pred_fallthru
        _
      %p185 = scmp.le.s32.totalorder 1, %s14
      %p186 = scmp.lt.s32.totalorder %s14, 5
      %p187 = pnand %p185, %p186
      %p188 = pneg %p187
      // Predicated region
      $region29: #{tpu_custom_call.1} parent=5 // pred_check
        _
      $region30: #{tpu_custom_call.1} parent=5 // pred_check_branch
        %190 = sbr.rel (%p187) target = $region32
      $region31: #{tpu_custom_call.1} parent=5 // pred_region
        %s191 = ssub.s32 %s14, 1
        %s192 = sand.u32 %s41, 1
        %s193 = scalar_lea.sflag [#allocation5], %s192
        %s194 = sand.u32 %s41, 1
        %s195 = smul.addr %s194, 16
        %s196 = scalar_lea.vmem [#allocation4], %s195
        // Predicated region
        $region33: #{tpu_custom_call.1} parent=31 // pred_check
          %p197 = pneg %p54
        $region34: #{tpu_custom_call.1} parent=31 // pred_check_branch
          %199 = sbr.rel (%p197) target = $region36
        $region35: #{tpu_custom_call.1} parent=31 // pred_region
          %200 = dma.done %s193, 256
        $region36: #{tpu_custom_call.1} parent=31 // pred_fallthru
          _
        %s201 = sand.u32 %s41, 1
        %s202 = scalar_lea.sflag [#allocation5], %s201
        %s203 = sand.u32 %s41, 1
        %s204 = smul.addr %s203, 16
        %s205 = scalar_lea.vmem [#allocation4], %s204
        %p206 = pneg %p54
        %p207 = pneg %p51
        %p208 = pneg %p75
        %p209 = pneg %p72
        %p210 = pneg %p96
        %p211 = pneg %p93
        %p212 = pneg %p117
        %p213 = pneg %p114
        %p214 = pneg %p138
        %p215 = pneg %p135
        %p216 = scmp.eq.s32.totalorder %s23, 0
        %p217 = scmp.eq.s32.totalorder %s24, 0
        %p218 = pnand %p216, %p217
        %p219 = pneg %p218
        %p220 = scmp.eq.s32.totalorder %s23, 1
        %p221 = scmp.eq.s32.totalorder %s24, 1
        %p222 = pnand %p220, %p221
        %p223 = pneg %p222
        // Predicated region
        $region37: #{tpu_custom_call.1} parent=31 // pred_check
          _
        $region38: #{tpu_custom_call.1} parent=31 // pred_check_branch
          %225 = sbr.rel (%p218) target = $region40
        $region39: #{tpu_custom_call.1} parent=31 // pred_region
          %vm226 = vcmask 7168
          %227 = vst.msk [vmem:[#allocation2] sm:$0xff] %vm226, 0.0
          %228 = vst.msk [vmem:[#allocation2 + $0x8] sm:$0xff] %vm226, 0.0
          %229 = vst.msk [vmem:[#allocation3] sm:$0xff] %vm226, 0.0
          %230 = vst.msk [vmem:[#allocation3 + $0x8] sm:$0xff] %vm226, 0.0
        $region40: #{tpu_custom_call.1} parent=31 // pred_fallthru
          _
        %v231 = vld [vmem:[%s196] sm:$0xff]
        %v232 = vld [vmem:[%s196 + $0x8] sm:$0xff]
        %v233 = vld [vmem:[#allocation2] sm:$0xff]
        %v234 = vld [vmem:[#allocation2 + $0x8] sm:$0xff]
        %235 = vadd.xlane.f32.xlu0 %v231
        %v236 = vpop.xlane.xlu0 %235
        %237 = vadd.xlane.f32.xlu0 %v232
        %v238 = vpop.xlane.xlu0 %237
        %v239 = vadd.f32 %v233, %v236
        %v240 = vadd.f32 %v234, %v238
        %vm241 = vcmask 7168
        %242 = vst.msk [vmem:[#allocation2] sm:$0xff] %vm241, %v239
        %243 = vst.msk [vmem:[#allocation2 + $0x8] sm:$0xff] %vm241, %v240
        %v244 = vld [vmem:[#allocation3] sm:$0xff]
        %v245 = vld [vmem:[#allocation3 + $0x8] sm:$0xff]
        %v246 = vmul.f32 %v231, %v231
        %v247 = vmul.f32 %v232, %v232
        %248 = vadd.xlane.f32.xlu0 %v246
        %v249 = vpop.xlane.xlu0 %248
        %250 = vadd.xlane.f32.xlu0 %v247
        %v251 = vpop.xlane.xlu0 %250
        %v252 = vadd.f32 %v244, %v249
        %v253 = vadd.f32 %v245, %v251
        %254 = vst.msk [vmem:[#allocation3] sm:$0xff] %vm241, %v252
        %255 = vst.msk [vmem:[#allocation3 + $0x8] sm:$0xff] %vm241, %v253
        // Predicated region
        $region41: #{tpu_custom_call.1} parent=31 // pred_check
          _
        $region42: #{tpu_custom_call.1} parent=31 // pred_check_branch
          %257 = sbr.rel (%p222) target = $region44
        $region43: #{tpu_custom_call.1} parent=31 // pred_region
          %v258 = vld [vmem:[#allocation2] sm:$0xff]
          %v259 = vld [vmem:[#allocation2 + $0x8] sm:$0xff]
          %v260 = vmul.f32 %v258, 0.001953125
          %v261 = vmul.f32 %v259, 0.001953125
          %v262 = vld [vmem:[#allocation3] sm:$0xff]
          %v263 = vld [vmem:[#allocation3 + $0x8] sm:$0xff]
          %v264 = vmul.f32 %v262, 0.001953125
          %v265 = vmul.f32 %v263, 0.001953125
          %v266 = vmul.f32 %v260, %v260
          %v267 = vmul.f32 %v261, %v261
          %v268 = vsub.f32 %v264, %v266
          %v269 = vsub.f32 %v265, %v267
          %v270 = vmax.f32 %v268, 0.0
          %v271 = vmax.f32 %v269, 0.0
          %v272 = vadd.f32 %v270, 1e-05
          %v273 = vadd.f32 %v271, 1e-05
          %v274 = vrsqrt.pop %v272
          %v275 = vrsqrt.pop %v273
          %v276 = vld [vmem:[%s1] sm:$0xff]
          %v277 = vld [vmem:[%s1 + $0x8] sm:$0xff]
          %v278 = vmul.f32 %v276, %v274
          %v279 = vmul.f32 %v277, %v275
          %280 = vst.msk [vmem:[%s3] sm:$0xff] %vm241, %v278
          %281 = vst.msk [vmem:[%s3 + $0x8] sm:$0xff] %vm241, %v279
          %v282 = vld [vmem:[%s2] sm:$0xff]
          %v283 = vld [vmem:[%s2 + $0x8] sm:$0xff]
          %v284 = vmul.f32 %v260, %v278
          %v285 = vmul.f32 %v261, %v279
          %v286 = vsub.f32 %v282, %v284
          %v287 = vsub.f32 %v283, %v285
          %288 = vst.msk [vmem:[%s4] sm:$0xff] %vm241, %v286
          %289 = vst.msk [vmem:[%s4 + $0x8] sm:$0xff] %vm241, %v287
        $region44: #{tpu_custom_call.1} parent=31 // pred_fallthru
          _
        // Predicated region
        $region45: #{tpu_custom_call.1} parent=31 // pred_check
          %p290 = pneg %p114
        $region46: #{tpu_custom_call.1} parent=31 // pred_check_branch
          %292 = sbr.rel (%p290) target = $region48
        $region47: #{tpu_custom_call.1} parent=31 // pred_region
          _
        $region48: #{tpu_custom_call.1} parent=31 // pred_fallthru
          _
        // Predicated region
        $region49: #{tpu_custom_call.1} parent=31 // pred_check
          %p293 = pneg %p135
        $region50: #{tpu_custom_call.1} parent=31 // pred_check_branch
          %295 = sbr.rel (%p293) target = $region52
        $region51: #{tpu_custom_call.1} parent=31 // pred_region
          _
        $region52: #{tpu_custom_call.1} parent=31 // pred_fallthru
          _
        // Predicated region
        $region53: #{tpu_custom_call.1} parent=31 // pred_check
          %p296 = pneg %p114
        $region54: #{tpu_custom_call.1} parent=31 // pred_check_branch
          %298 = sbr.rel (%p296) target = $region56
        $region55: #{tpu_custom_call.1} parent=31 // pred_region
          _
        $region56: #{tpu_custom_call.1} parent=31 // pred_fallthru
          _
        // Predicated region
        $region57: #{tpu_custom_call.1} parent=31 // pred_check
          %p299 = pneg %p135
        $region58: #{tpu_custom_call.1} parent=31 // pred_check_branch
          %301 = sbr.rel (%p299) target = $region60
        $region59: #{tpu_custom_call.1} parent=31 // pred_region
          _
        $region60: #{tpu_custom_call.1} parent=31 // pred_fallthru
          _
      $region32: #{tpu_custom_call.1} parent=5 // pred_fallthru
        _
      %p302 = scmp.le.s32.totalorder 2, %s14
      // Predicated region
      $region61: #{tpu_custom_call.1} parent=5 // pred_check
        %p303 = pneg %p302
      $region62: #{tpu_custom_call.1} parent=5 // pred_check_branch
        %305 = sbr.rel (%p303) target = $region64
      $region63: #{tpu_custom_call.1} parent=5 // pred_region
        %s306 = ssub.s32 %s14, 2
      $region64: #{tpu_custom_call.1} parent=5 // pred_fallthru
        _
    $region6: #{tpu_custom_call.1} parent=1 // loop_footer
      %s18 = sadd.s32 1, %s14
    $region7: #{tpu_custom_call.1} parent=1 // loop_footer_branch
      %13 = sbr.rel target = $region3
    $region8: #{tpu_custom_call.1} parent=1 // loop_exit
      _
    %307 = vsyncpa [#allocation5], 1
    %s308 = scalar_lea.sflag [#allocation5], 1
    %309 = vsyncpa %s308, 1

</llo_original>
